<compile_context>
chip_gen: v7x
topology: tpu7x:2x2x1
jax: 0.10.0
libtpu: 0.0.40
codegen_flags: <defaults>
</compile_context>

<pallas_src>
import functools

import jax
import jax.numpy as jnp
import numpy as np
from jax.experimental import pallas as pl
from jax.experimental.pallas import tpu as pltpu


def dwsc_kernel(x_ref, wdw_ref, wpw_ref, bias_ref, out_ref, ydw_ref, *,
                L, K, strip_w):
    """One grid step: Bt batch segments laid side-by-side along lanes.

    x_ref   : (C, Bt*L)      input slab (Bt segments of width L)
    wdw_ref : (C, K)   f32   depthwise weights
    wpw_ref : (C, C)   cdt   pointwise (1x1) weights [out_ch, in_ch]
    bias_ref: (C, 1)   f32   combined bias = W_pw @ b_dw + b_pw
    out_ref : (C, Bt*L)      output slab
    ydw_ref : (C, Bt*L) cdt  VMEM scratch: depthwise result (MXU RHS)
    """
    C, N = x_ref.shape
    pad = K // 2
    n_strips = N // strip_w

    wdw = wdw_ref[...].astype(jnp.float32)            # (C, K), tiny — hoisted

    # Column position inside its batch segment; per-tap validity masks
    # recreate the zero halo.  Strips always hold whole batch segments, so
    # the masks are strip-invariant and hoisted out of the strip loop.
    pos = jax.lax.broadcasted_iota(jnp.int32, (1, strip_w), 1) % L
    masks = []
    for k in range(K):
        s = k - pad
        if s == 0:
            masks.append(None)
        elif s < 0:
            masks.append(pos >= -s)
        else:
            masks.append(pos < L - s)

    def strip_fma(start):
        xs = x_ref[:, pl.ds(start, strip_w)].astype(jnp.float32)
        acc = xs * wdw[:, pad:pad + 1]                 # center tap (shift 0)
        for k in range(K):
            s = k - pad
            if s == 0:
                continue
            shifted = pltpu.roll(xs, shift=(-s) % strip_w, axis=1)   # XLU
            acc = acc + jnp.where(masks[k], shifted, 0.0) * wdw[:, k:k + 1]
        return acc

    if n_strips == 1:
        ydw_ref[...] = strip_fma(0).astype(ydw_ref.dtype)
    else:
        def body(si, carry):
            start = si * strip_w
            if strip_w % 128 == 0:
                start = pl.multiple_of(start, 128)
            ydw_ref[:, pl.ds(start, strip_w)] = (
                strip_fma(start).astype(ydw_ref.dtype))
            return carry
        jax.lax.fori_loop(0, n_strips, body, 0, unroll=True)

    # Pointwise 1x1 conv: one wide, lane-dense MXU matmul + single store.
    y = jnp.dot(wpw_ref[...], ydw_ref[...], preferred_element_type=jnp.float32)
    out_ref[...] = (y + bias_ref[...]).astype(out_ref.dtype)


def _round_up(v, m):
    return -(-v // m) * m


def _vmem_capacity_bytes():
    try:
        return int(pltpu.get_tpu_info().vmem_capacity_bytes)
    except Exception:
        return 64 * 1024 * 1024            # conservative fallback (v7x per-TC)


def _step_vmem_bytes(bt, C, L, in_bytes, cdt_bytes):
    """Per-grid-step VMEM working set, (8,128)-padding aware."""
    Cr = _round_up(C, 8)
    W = _round_up(bt * L, 128)
    x_blk = 2 * Cr * W * in_bytes          # double-buffered input block
    o_blk = 2 * Cr * W * in_bytes          # double-buffered output block
    ydw = Cr * W * cdt_bytes               # depthwise scratch (MXU RHS)
    y_tmp = Cr * W * 4                     # f32 matmul result before store
    return x_blk + o_blk + ydw + y_tmp


def _choose_batch_tile(B, C, L, in_bytes, cdt_bytes, budget, target_lanes=1024):
    """Largest divisor of B whose slab fits `budget`, preferring >=2 grid
    steps (megacore / v7x) and stopping once the slab reaches `target_lanes`.
    Slab width must be 128-lane aligned unless the tile covers the full
    batch (full-array block shapes are always legal)."""
    cands = [bt for bt in range(1, B + 1)
             if B % bt == 0 and ((bt * L) % 128 == 0 or bt == B)]
    multi = [bt for bt in cands if B // bt >= 2]
    pool = multi if multi else cands
    best = pool[0]
    for bt in pool:
        if _step_vmem_bytes(bt, C, L, in_bytes, cdt_bytes) > budget:
            break
        best = bt
        if bt * L >= target_lanes:
            break
    return best


def _choose_strip_width(Bt, L, target=512):
    """Lane-strip width for the depthwise accumulator: whole batch segments,
    as wide as possible without exceeding ~`target` columns."""
    nb = 1
    for cand in range(1, Bt + 1):
        if Bt % cand == 0 and cand * L <= target:
            nb = cand
    return nb * L


def depthwise_separable_block(x, w_dw, b_dw, w_pw, b_pw, kernel_size, *,
                              use_bf16_matmul=False):
    """x: (B, C, L) -> (B, C, L).  Matches
    nn.Conv1d(C, C, K, padding=K//2, groups=C) followed by nn.Conv1d(C, C, 1)."""
    B, C, L = x.shape
    K = int(kernel_size)
    if K % 2 != 1:
        # TODO(synk): even kernel_size gives L_out = L + 1 (non-uniform slab
        # shift); not supported by this fused slab kernel.
        raise NotImplementedError("depthwise_separable_block: odd kernel_size only")

    in_dt = x.dtype
    # bf16 inputs use the bf16 MXU path (f32 accumulation); f32 stays exact
    # unless use_bf16_matmul=True (avoids the emulated f32 MXU on v6e/v7x).
    cdt = jnp.bfloat16 if (in_dt == jnp.bfloat16 or use_bf16_matmul) else jnp.float32

    w_dw2 = w_dw.reshape(C, K).astype(jnp.float32)
    w_pw2 = w_pw.reshape(C, C)
    # Fold the depthwise bias into the pointwise bias (pointwise is linear):
    #   W_pw @ (y + b_dw) + b_pw == W_pw @ y + (W_pw @ b_dw + b_pw)
    b_comb = (w_pw2.astype(jnp.float32) @ b_dw.reshape(C).astype(jnp.float32)
              + b_pw.reshape(C).astype(jnp.float32)).reshape(C, 1)
    w_pw2 = w_pw2.astype(cdt)

    # Channel-major slab layout: kernel input and output are lane-dense slabs.
    x_slab = jnp.transpose(x, (1, 0, 2)).reshape(C, B * L)

    capacity = _vmem_capacity_bytes()
    budget = capacity // 4                 # ~32 MiB v5e/v6e, ~16 MiB v7x
    in_bytes = np.dtype(in_dt).itemsize
    cdt_bytes = np.dtype(cdt).itemsize
    Bt = _choose_batch_tile(B, C, L, in_bytes, cdt_bytes, budget)
    N = Bt * L
    strip_w = _choose_strip_width(Bt, L)
    grid = (B // Bt,)
    # TODO(synk): for B < 2 or sequences so long that even Bt=1 overflows the
    # VMEM budget, add a second 'parallel' grid axis tiling L with a K-1 halo.

    kernel = functools.partial(dwsc_kernel, L=L, K=K, strip_w=strip_w)

    out_slab = pl.pallas_call(
        kernel,
        out_shape=jax.ShapeDtypeStruct((C, B * L), in_dt),
        grid_spec=pltpu.PrefetchScalarGridSpec(
            num_scalar_prefetch=0,
            grid=grid,
            in_specs=[
                pl.BlockSpec((C, N), lambda i: (0, i)),
                pl.BlockSpec((C, K), lambda i: (0, 0)),
                pl.BlockSpec((C, C), lambda i: (0, 0)),
                pl.BlockSpec((C, 1), lambda i: (0, 0)),
            ],
            out_specs=pl.BlockSpec((C, N), lambda i: (0, i)),
            scratch_shapes=[pltpu.VMEM((C, N), cdt)],
        ),
        compiler_params=pltpu.CompilerParams(
            dimension_semantics=("parallel",),
            vmem_limit_bytes=int(capacity // 2),
        ),
    )(x_slab, w_dw2, w_pw2, b_comb)

    return jnp.transpose(out_slab.reshape(C, B, L), (1, 0, 2))


def reference(x, w_dw, b_dw, w_pw, b_pw, kernel_size):
    """Pure-JAX reference mirroring PyTorch Conv1d semantics."""
    B, C, L = x.shape
    K = int(kernel_size)
    pad = K // 2
    xp = jnp.pad(x.astype(jnp.float32), ((0, 0), (0, 0), (pad, pad)))
    L_out = L + 2 * pad - K + 1
    wd = w_dw.reshape(C, K).astype(jnp.float32)
    y = jnp.zeros((B, C, L_out), jnp.float32)
    for k in range(K):
        y = y + xp[:, :, k:k + L_out] * wd[None, :, k:k + 1]
    y = y + b_dw.reshape(C)[None, :, None]
    z = jnp.einsum("oc,bcl->bol", w_pw.reshape(C, C).astype(jnp.float32), y)
    z = z + b_pw.reshape(C)[None, :, None]
    return z.astype(x.dtype)


if __name__ == "__main__":
    kernel_size = 3
    key = jax.random.PRNGKey(0)

    # --- small f32 test (single grid step, single strip) ---
    B, C, L = 2, 4, 16
    kx, k1, k2, k3, k4 = jax.random.split(key, 5)
    x = jax.random.normal(kx, (B, C, L), dtype=jnp.float32)
    w_dw = jax.random.normal(k1, (C, kernel_size), dtype=jnp.float32) * 0.1
    b_dw = jax.random.normal(k2, (C,), dtype=jnp.float32) * 0.1
    w_pw = jax.random.normal(k3, (C, C), dtype=jnp.float32) * 0.1
    b_pw = jax.random.normal(k4, (C,), dtype=jnp.float32) * 0.1

    out = jax.block_until_ready(
        depthwise_separable_block(x, w_dw, b_dw, w_pw, b_pw, kernel_size))
    ref = reference(x, w_dw, b_dw, w_pw, b_pw, kernel_size)
    assert out.shape == (B, C, L), out.shape
    np.testing.assert_allclose(np.asarray(out), np.asarray(ref),
                               rtol=1e-5, atol=1e-5)

    # --- small bf16 test (bf16 MXU operands, f32 accumulation) ---
    x16 = x.astype(jnp.bfloat16)
    out16 = jax.block_until_ready(
        depthwise_separable_block(x16, w_dw, b_dw, w_pw, b_pw, kernel_size))
    ref16 = reference(x16, w_dw, b_dw, w_pw, b_pw, kernel_size)
    np.testing.assert_allclose(np.asarray(out16.astype(jnp.float32)),
                               np.asarray(ref16.astype(jnp.float32)),
                               rtol=5e-2, atol=5e-2)

    # --- medium f32 test (multi-step 'parallel' grid + multi-strip fori_loop) ---
    B2, C2, L2 = 64, 8, 32
    kx2, k5, k6, k7, k8 = jax.random.split(jax.random.PRNGKey(1), 5)
    x2 = jax.random.normal(kx2, (B2, C2, L2), dtype=jnp.float32)
    w_dw2 = jax.random.normal(k5, (C2, kernel_size), dtype=jnp.float32) * 0.1
    b_dw2 = jax.random.normal(k6, (C2,), dtype=jnp.float32) * 0.1
    w_pw2 = jax.random.normal(k7, (C2, C2), dtype=jnp.float32) * 0.1
    b_pw2 = jax.random.normal(k8, (C2,), dtype=jnp.float32) * 0.1

    out2 = jax.block_until_ready(
        depthwise_separable_block(x2, w_dw2, b_dw2, w_pw2, b_pw2, kernel_size))
    ref2 = reference(x2, w_dw2, b_dw2, w_pw2, b_pw2, kernel_size)
    assert out2.shape == (B2, C2, L2), out2.shape
    np.testing.assert_allclose(np.asarray(out2), np.asarray(ref2),
                               rtol=1e-5, atol=1e-5)

    print("KERNEL_OK")
</pallas_src>

<mosaic_0001>
module attributes {stable_mosaic.version = 11 : i64} {
  func.func @dwsc_kernel(%arg0: i32, %arg1: memref<4x32xf32, #tpu.memory_space<vmem>>, %arg2: memref<4x3xf32, #tpu.memory_space<vmem>>, %arg3: memref<4x4xf32, #tpu.memory_space<vmem>>, %arg4: memref<4x1xf32, #tpu.memory_space<vmem>>, %arg5: memref<4x32xf32, #tpu.memory_space<vmem>>, %arg6: memref<4x32xf32, #tpu.memory_space<vmem>>) attributes {dimension_semantics = [#tpu.dimension_semantics<parallel>], iteration_bounds = array<i64: 1>, scalar_prefetch = 0 : i64, scratch_operands = 1 : i64, tpu.core_type = #tpu.core_type<tc>, window_params = [{transform_indices = @transform_0, window_bounds = array<i64: 4, 32>}, {pipeline_mode = #tpu.pipeline_mode<synchronous>, transform_indices = @transform_1, window_bounds = array<i64: 4, 3>}, {pipeline_mode = #tpu.pipeline_mode<synchronous>, transform_indices = @transform_2, window_bounds = array<i64: 4, 4>}, {pipeline_mode = #tpu.pipeline_mode<synchronous>, transform_indices = @transform_3, window_bounds = array<i64: 4, 1>}, {transform_indices = @transform_4, window_bounds = array<i64: 4, 32>}]} {
    %c0 = arith.constant 0 : index
    %c0_0 = arith.constant 0 : index
    %0 = vector.load %arg2[%c0, %c0_0] : memref<4x3xf32, #tpu.memory_space<vmem>>, vector<4x3xf32>
    %1 = tpu.iota {dimensions = array<i32: 1>} : vector<1x32xi32>
    %c16_i32 = arith.constant 16 : i32
    %c0_i32 = arith.constant 0 : i32
    %2 = arith.cmpi eq, %c16_i32, %c0_i32 : i32
    %c1_i32 = arith.constant 1 : i32
    %3 = arith.select %2, %c1_i32, %c16_i32 : i32
    %4 = vector.broadcast %3 : i32 to vector<1x32xi32>
    %5 = arith.remsi %1, %4 : vector<1x32xi32>
    %c0_i32_1 = arith.constant 0 : i32
    %6 = vector.broadcast %c0_i32_1 : i32 to vector<1x32xi32>
    %7 = arith.cmpi ne, %5, %6 : vector<1x32xi32>
    %c0_i32_2 = arith.constant 0 : i32
    %8 = vector.broadcast %c0_i32_2 : i32 to vector<1x32xi32>
    %9 = arith.cmpi slt, %5, %8 : vector<1x32xi32>
    %c0_i32_3 = arith.constant 0 : i32
    %10 = arith.cmpi slt, %3, %c0_i32_3 : i32
    %11 = vector.broadcast %10 : i1 to vector<1x32xi1>
    %12 = vector.broadcast %11 : vector<1x32xi1> to vector<1x32xi1>
    %13 = arith.xori %9, %12 : vector<1x32xi1>
    %14 = arith.andi %13, %7 : vector<1x32xi1>
    %15 = vector.broadcast %3 : i32 to vector<1x32xi32>
    %16 = arith.addi %5, %15 : vector<1x32xi32>
    %17 = arith.select %14, %16, %5 : vector<1x32xi1>, vector<1x32xi32>
    %c1_i32_4 = arith.constant 1 : i32
    %18 = vector.broadcast %c1_i32_4 : i32 to vector<1x32xi32>
    %19 = arith.cmpi sge, %17, %18 : vector<1x32xi32>
    %c15_i32 = arith.constant 15 : i32
    %20 = vector.broadcast %c15_i32 : i32 to vector<1x32xi32>
    %21 = arith.cmpi slt, %17, %20 : vector<1x32xi32>
    %c0_5 = arith.constant 0 : index
    %c0_6 = arith.constant 0 : index
    %22 = vector.load %arg1[%c0_5, %c0_6] : memref<4x32xf32, #tpu.memory_space<vmem>>, vector<4x32xf32>
    %23 = vector.extract_strided_slice %0 {offsets = [0, 1], sizes = [4, 1], strides = [1, 1]} : vector<4x3xf32> to vector<4x1xf32>
    %24 = vector.broadcast %23 : vector<4x1xf32> to vector<4x32xf32>
    %25 = arith.mulf %22, %24 : vector<4x32xf32>
    %c1_i32_7 = arith.constant 1 : i32
    %26 = tpu.dynamic_rotate %22 by %c1_i32_7 dim 1 : vector<4x32xf32>, i32 -> vector<4x32xf32>
    %cst = arith.constant 0.000000e+00 : f32
    %27 = vector.shape_cast %19 : vector<1x32xi1> to vector<1x32xi1>
    %28 = vector.broadcast %27 : vector<1x32xi1> to vector<4x32xi1>
    %29 = vector.broadcast %cst : f32 to vector<4x32xf32>
    %30 = arith.select %28, %26, %29 : vector<4x32xi1>, vector<4x32xf32>
    %31 = vector.extract_strided_slice %0 {offsets = [0, 0], sizes = [4, 1], strides = [1, 1]} : vector<4x3xf32> to vector<4x1xf32>
    %32 = vector.broadcast %31 : vector<4x1xf32> to vector<4x32xf32>
    %33 = arith.mulf %30, %32 : vector<4x32xf32>
    %34 = arith.addf %25, %33 : vector<4x32xf32>
    %c31_i32 = arith.constant 31 : i32
    %35 = tpu.dynamic_rotate %22 by %c31_i32 dim 1 : vector<4x32xf32>, i32 -> vector<4x32xf32>
    %cst_8 = arith.constant 0.000000e+00 : f32
    %36 = vector.shape_cast %21 : vector<1x32xi1> to vector<1x32xi1>
    %37 = vector.broadcast %36 : vector<1x32xi1> to vector<4x32xi1>
    %38 = vector.broadcast %cst_8 : f32 to vector<4x32xf32>
    %39 = arith.select %37, %35, %38 : vector<4x32xi1>, vector<4x32xf32>
    %40 = vector.extract_strided_slice %0 {offsets = [0, 2], sizes = [4, 1], strides = [1, 1]} : vector<4x3xf32> to vector<4x1xf32>
    %41 = vector.broadcast %40 : vector<4x1xf32> to vector<4x32xf32>
    %42 = arith.mulf %39, %41 : vector<4x32xf32>
    %43 = arith.addf %34, %42 : vector<4x32xf32>
    %c0_9 = arith.constant 0 : index
    %c0_10 = arith.constant 0 : index
    %44 = vector.load %arg6[%c0_9, %c0_10] : memref<4x32xf32, #tpu.memory_space<vmem>>, vector<4x32xf32>
    tpu.vector_store %arg6[%c0_9, %c0_10], %43 {strides = array<i32>} : memref<4x32xf32, #tpu.memory_space<vmem>>, vector<4x32xf32>,
    %c0_11 = arith.constant 0 : index
    %c0_12 = arith.constant 0 : index
    %45 = vector.load %arg3[%c0_11, %c0_12] : memref<4x4xf32, #tpu.memory_space<vmem>>, vector<4x4xf32>
    %c0_13 = arith.constant 0 : index
    %c0_14 = arith.constant 0 : index
    %46 = vector.load %arg6[%c0_13, %c0_14] : memref<4x32xf32, #tpu.memory_space<vmem>>, vector<4x32xf32>
    %cst_15 = arith.constant dense<0.000000e+00> : vector<4x32xf32>
    %47 = tpu.matmul %45, %46, %cst_15 {dimension_numbers = #tpu.dot_dimension_numbers<[1], [0], [0], [1], [0, 0, 1, 1], [], []>} : vector<4x4xf32>, vector<4x32xf32>, vector<4x32xf32> -> vector<4x32xf32>
    %c0_16 = arith.constant 0 : index
    %c0_17 = arith.constant 0 : index
    %48 = vector.load %arg4[%c0_16, %c0_17] : memref<4x1xf32, #tpu.memory_space<vmem>>, vector<4x1xf32>
    %49 = vector.broadcast %48 : vector<4x1xf32> to vector<4x32xf32>
    %50 = arith.addf %47, %49 : vector<4x32xf32>
    %c0_18 = arith.constant 0 : index
    %c0_19 = arith.constant 0 : index
    %51 = vector.load %arg5[%c0_18, %c0_19] : memref<4x32xf32, #tpu.memory_space<vmem>>, vector<4x32xf32>
    tpu.vector_store %arg5[%c0_18, %c0_19], %50 {strides = array<i32>} : memref<4x32xf32, #tpu.memory_space<vmem>>, vector<4x32xf32>,
    return
  }
  func.func @transform_0(%arg0: i32) -> (i32, i32) {
    %c0_i32 = arith.constant 0 : i32
    %c0_i32_0 = arith.constant 0 : i32
    return %c0_i32, %arg0 : i32, i32
  }
  func.func @transform_1(%arg0: i32) -> (i32, i32) {
    %c0_i32 = arith.constant 0 : i32
    %c0_i32_0 = arith.constant 0 : i32
    %c0_i32_1 = arith.constant 0 : i32
    return %c0_i32, %c0_i32_0 : i32, i32
  }
  func.func @transform_2(%arg0: i32) -> (i32, i32) {
    %c0_i32 = arith.constant 0 : i32
    %c0_i32_0 = arith.constant 0 : i32
    %c0_i32_1 = arith.constant 0 : i32
    return %c0_i32, %c0_i32_0 : i32, i32
  }
  func.func @transform_3(%arg0: i32) -> (i32, i32) {
    %c0_i32 = arith.constant 0 : i32
    %c0_i32_0 = arith.constant 0 : i32
    %c0_i32_1 = arith.constant 0 : i32
    return %c0_i32, %c0_i32_0 : i32, i32
  }
  func.func @transform_4(%arg0: i32) -> (i32, i32) {
    %c0_i32 = arith.constant 0 : i32
    %c0_i32_0 = arith.constant 0 : i32
    return %c0_i32, %arg0 : i32, i32
  }
}

</mosaic_0001>

<llo_original>
// kernel: tpu_custom_call.1
$region0: #{tpu_custom_call.1}
  #allocation0 [shape = 'u32[]', space=smem, size = 0x4, offset = 0x4, fixed_abs, tag = 'smem constant byte address 0x4 - core index']
  #allocation1 [shape = 'u32[144,128]{1,0:T(1,128)}', space=vmem, size = 0x12000, scoped, tag = 'internal scratch']
  #allocation2 [shape = 'f32[4,32]{1,0:T(4,128)}', space=vmem, size = 0x800, scoped, tag = 'scratch operand']
  %s0 = inlined_call_operand.vmem [shape: f32[4,32], index: 0, kind: input, shape index: {}]
  %s1 = inlined_call_operand.vmem [shape: f32[4,3], index: 1, kind: input, shape index: {}]
  %s2 = inlined_call_operand.vmem [shape: f32[4,4], index: 2, kind: input, shape index: {}]
  %s3 = inlined_call_operand.vmem [shape: f32[4,1], index: 3, kind: input, shape index: {}]
  %s4 = inlined_call_operand.hbm [shape: f32[4,32], index: 4, kind: output, shape index: {}]
  %s5 = sld [smem:[#allocation0]]
  $region26: #{tpu_custom_call.1} parent=0
    _
  %s7 = ssub.s32 1, %s5
  %s8 = scalar_select 0, %s7, %s5
  $region1: #{tpu_custom_call.1} parent=0
    #allocation3 [shape = 'u8[2048]{0}', space=vmem, size = 0x800, scoped, tag = 'output window, operand 0, single buffered']
    #allocation4 [shape = 's32[1]{0}', space=sflag, size = 0x4, scoped, tag = 'scoped memory for tpu_custom_call.1']
    %9 = vsyncpa [#allocation4], 0
    // Predicated region
    $region2: #{tpu_custom_call.1} parent=1 // pred_check
      _
    $region3: #{tpu_custom_call.1} parent=1 // pred_check_branch
      %11 = sbr.rel (0) target = $region5
    $region4: #{tpu_custom_call.1} parent=1 // pred_region
      _
    $region5: #{tpu_custom_call.1} parent=1 // pred_fallthru
      _
    // Predicated region
    $region6: #{tpu_custom_call.1} parent=1 // pred_check
      _
    $region7: #{tpu_custom_call.1} parent=1 // pred_check_branch
      %13 = sbr.rel (0) target = $region9
    $region8: #{tpu_custom_call.1} parent=1 // pred_region
      _
    $region9: #{tpu_custom_call.1} parent=1 // pred_fallthru
      _
    // Predicated region
    $region10: #{tpu_custom_call.1} parent=1 // pred_check
      _
    $region11: #{tpu_custom_call.1} parent=1 // pred_check_branch
      %15 = sbr.rel (0) target = $region13
    $region12: #{tpu_custom_call.1} parent=1 // pred_region
      _
    $region13: #{tpu_custom_call.1} parent=1 // pred_fallthru
      _
    // Predicated region
    $region14: #{tpu_custom_call.1} parent=1 // pred_check
      _
    $region15: #{tpu_custom_call.1} parent=1 // pred_check_branch
      %17 = sbr.rel (0) target = $region17
    $region16: #{tpu_custom_call.1} parent=1 // pred_region
      _
    $region17: #{tpu_custom_call.1} parent=1 // pred_fallthru
      _
    %v18 = vld [vmem:[%s1] sm:$0xf]
    %v19 = vlaneseq
    %v20 = vand.u32 %v19, 127
    %vm21 = vcmp.lt.s32.totalorder %v20, 0
    %v22 = vsub.s32 0, %v20
    %v23 = vsel %vm21, %v22, %v20
    %v24 = vshrl.u32 %v23, 4
    %v25 = vand.u32 %v23, 15
    %v26 = vsub.s32 0, %v25
    %v27 = vsel %vm21, %v26, %v25
    %vm28 = vcmp.ne.s32.totalorder %v27, 0
    %vm29 = vcmp.lt.s32.totalorder %v27, 0
    %vm30 = vmand %vm29, %vm28
    %v31 = vadd.s32 %v27, 16
    %v32 = vsel %vm30, %v31, %v27
    %vm33 = vcmp.ge.s32.totalorder %v32, 1
    %vm34 = vcmp.lt.s32.totalorder %v32, 15
    %v35 = vld [vmem:[%s0] sm:$0xf]
    %37 = vset.pattern.permute.xlu0 1
    %38 = vperm.xlu0 %37, %v18
    %v39 = vpop.permute.xlu0 %38
    %v41 = vmul.f32 %v35, %v39
    %vm42 = vcmask 1047808
    %43 = vrot.lane.b32.xlu0 %v35, 32
    %v44 = vpop.permute.xlu0 %43
    %v45 = vsel %vm42, %v44, %v35
    %46 = vrot.lane.b32.xlu0 %v45, 32
    %v47 = vpop.permute.xlu0 %46
    %v48 = vsel %vm42, %v47, %v35
    %v49 = vsel %vm33, 1, 0
    %vm50 = vcmp.eq.s32.totalorder %v49, 1
    %52 = vrot.lane.b32.xlu0 %v48, 97
    %v53 = vpop.permute.xlu0 %52
    %v55 = vsel %vm50, %v53, 0.0
    %56 = vset.pattern.permute.xlu0 0
    %57 = vperm.xlu0 %56, %v18
    %v58 = vpop.permute.xlu0 %57
    %v60 = vmul.f32 %v55, %v58
    %v61 = vadd.f32 %v41, %v60
    %v62 = vsel %vm34, 1, 0
    %vm63 = vcmp.eq.s32.totalorder %v62, 1
    %64 = vrot.lane.b32.xlu0 %v48, 127
    %v65 = vpop.permute.xlu0 %64
    %v67 = vsel %vm63, %v65, 0.0
    %68 = vset.pattern.permute.xlu0 2
    %69 = vperm.xlu0 %68, %v18
    %v70 = vpop.permute.xlu0 %69
    %v72 = vmul.f32 %v67, %v70
    %v73 = vadd.f32 %v61, %v72
    %vm74 = vcmask 257024
    %75 = vst.msk [vmem:[#allocation2] sm:$0xf] %vm74, %v73
    %v76 = vld [vmem:[%s2] sm:$0xf]
    %v77 = vld [vmem:[#allocation2] sm:$0xf]
    %v78 = vld [vmem:[%s3] sm:$0xf]
    %80 = vset.pattern.permute.xlu0 0
    %81 = vperm.xlu0 %80, %v78
    %v82 = vpop.permute.xlu0 %81
    %vm84 = vcmask 31744
    %v86 = vsel %vm84, %v76, 0
    %vm88 = vcmask 1043456
    %v90 = vsel %vm88, %v77, 0
    %92 = vmatprep.subr.mxu0 0.0
    %93 = vmatpush1.msra.mxu0 %v90
    %94 = vmatprep.subr.mxu0 0.0
    %95 = vmatpush1.msra.mxu0 0.0
    %96 = vmatprep.subr.mxu0 0.0
    %97 = vmatpush1.msra.mxu0 0.0
    %98 = vmatprep.subr.mxu0 0.0
    %99 = vmatpush1.msra.mxu0 0.0
    %100 = vmatprep.subr.mxu0 0.0
    %101 = vmatpush1.msra.mxu0 0.0
    %102 = vmatprep.subr.mxu0 0.0
    %103 = vmatpush1.msra.mxu0 0.0
    %104 = vmatprep.subr.mxu0 0.0
    %105 = vmatpush1.msra.mxu0 0.0
    %106 = vmatprep.subr.mxu0 0.0
    %107 = vmatpush1.msra.mxu0 0.0
    %108 = vmatprep.subr.mxu0 0.0
    %109 = vmatpush1.msra.mxu0 0.0
    %110 = vmatprep.subr.mxu0 0.0
    %111 = vmatpush1.msra.mxu0 0.0
    %112 = vmatprep.subr.mxu0 0.0
    %113 = vmatpush1.msra.mxu0 0.0
    %114 = vmatprep.subr.mxu0 0.0
    %115 = vmatpush1.msra.mxu0 0.0
    %116 = vmatprep.subr.mxu0 0.0
    %117 = vmatpush1.msra.mxu0 0.0
    %118 = vmatprep.subr.mxu0 0.0
    %119 = vmatpush1.msra.mxu0 0.0
    %120 = vmatprep.subr.mxu0 0.0
    %121 = vmatpush1.msra.mxu0 0.0
    %122 = vmatprep.subr.mxu0 0.0
    %123 = vmatpush1.msra.mxu0 0.0
    %124 = vmatprep.subr.mxu0 0.0
    %125 = vmatpush1.msra.mxu0 0.0
    %126 = vmatprep.subr.mxu0 0.0
    %127 = vmatpush1.msra.mxu0 0.0
    %128 = vmatprep.subr.mxu0 0.0
    %129 = vmatpush1.msra.mxu0 0.0
    %130 = vmatprep.subr.mxu0 0.0
    %131 = vmatpush1.msra.mxu0 0.0
    %132 = vmatprep.subr.mxu0 0.0
    %133 = vmatpush1.msra.mxu0 0.0
    %134 = vmatprep.subr.mxu0 0.0
    %135 = vmatpush1.msra.mxu0 0.0
    %136 = vmatprep.subr.mxu0 0.0
    %137 = vmatpush1.msra.mxu0 0.0
    %138 = vmatprep.subr.mxu0 0.0
    %139 = vmatpush1.msra.mxu0 0.0
    %140 = vmatprep.subr.mxu0 0.0
    %141 = vmatpush1.msra.mxu0 0.0
    %142 = vmatprep.subr.mxu0 0.0
    %143 = vmatpush1.msra.mxu0 0.0
    %144 = vmatprep.subr.mxu0 0.0
    %145 = vmatpush1.msra.mxu0 0.0
    %146 = vmatprep.subr.mxu0 0.0
    %147 = vmatpush1.msra.mxu0 0.0
    %148 = vmatprep.subr.mxu0 0.0
    %149 = vmatpush1.msra.mxu0 0.0
    %150 = vmatprep.subr.mxu0 0.0
    %151 = vmatpush1.msra.mxu0 0.0
    %152 = vmatprep.subr.mxu0 0.0
    %153 = vmatpush1.msra.mxu0 0.0
    %154 = vmatprep.subr.mxu0 0.0
    %155 = vmatpush1.msra.mxu0 0.0
    %156 = vmatprep.mubr.f32.mxu0 0.0
    %157 = vmatmul.mubr.f32.gmra.mrb[0].mxu0 %v86
    %v158 = vpop.f32.mrb[0].mxu0
    %v159 = vadd.f32 %v82, %v158
    %v160 = vpop.f32.mrb[0].mxu0
    %161 = vdwg.mxu0
    %162 = vst.msk [vmem:[#allocation3] sm:$0xf] %vm74, %v159
    // Predicated region
    $region18: #{tpu_custom_call.1} parent=1 // pred_check
      _
    $region19: #{tpu_custom_call.1} parent=1 // pred_check_branch
      %164 = sbr.rel (0) target = $region21
    $region20: #{tpu_custom_call.1} parent=1 // pred_region
      %s166 = ssub.s32 64, 64
      %167 = vsyncadd [#allocation4], %s166
      %s169 = sshll.u32 [#allocation3], 4
      %s170 = int_to_ptr.vmem [resolvable:$true] %s169
      %172 = dma.vmem_to_hbm [thread:$0]  %s170, 64, %s4, [#allocation4]
    $region21: #{tpu_custom_call.1} parent=1 // pred_fallthru
      _
    // Predicated region
    $region22: #{tpu_custom_call.1} parent=1 // pred_check
      _
    $region23: #{tpu_custom_call.1} parent=1 // pred_check_branch
      %174 = sbr.rel (0) target = $region25
    $region24: #{tpu_custom_call.1} parent=1 // pred_region
      %175 = dma.done [#allocation4], 64
    $region25: #{tpu_custom_call.1} parent=1 // pred_fallthru
      _
    %176 = vsyncpa [#allocation4], 1

</llo_original>
